<compile_context>
chip_gen: v6e
topology: v6e:2x2x1
jax: 0.10.0
libtpu: 0.0.40
codegen_flags: <defaults>
</compile_context>

<pallas_src>
import math

import jax
import jax.numpy as jnp
from jax.experimental import pallas as pl
from jax.experimental.pallas import tpu as pltpu


# Packed-parameter row layout inside the (16, 128) slab (cols 0:4 / 0:3 used):
#   rows 0:2  -> w1 (2, 4)     row 2  -> b1 (4,)
#   rows 3:7  -> w2 (4, 4)     row 7  -> b2 (4,)
#   rows 8:12 -> w3 (4, 3)     row 12 -> b3 (3,)
_PACK_ROWS = 16
_PACK_COLS = 128


def mlp_kernel(x_ref, p_ref, o_ref):
    """Fused MLP forward for one batch block: relu(fc1) -> relu(fc2) -> softmax(fc3)."""
    x = x_ref[...]          # (bm, 2) f32
    p = p_ref[...]          # (16, 128) f32, packed params (2 vregs, single DMA)

    # ---- layer 1: 2 -> 4, ReLU (unrolled VPU FMAs, bias seeds the accumulator)
    h1 = p[2:3, 0:4]                          # (1, 4) bias, broadcasts over batch
    h1 = h1 + x[:, 0:1] * p[0:1, 0:4]
    h1 = h1 + x[:, 1:2] * p[1:2, 0:4]
    h1 = jnp.maximum(h1, 0.0)                 # (bm, 4)

    # ---- layer 2: 4 -> 4, ReLU
    h2 = p[7:8, 0:4]
    for k in range(4):
        h2 = h2 + h1[:, k:k + 1] * p[3 + k:4 + k, 0:4]
    h2 = jnp.maximum(h2, 0.0)                 # (bm, 4)

    # ---- layer 3: 4 -> 3, softmax(dim=-1)
    z = p[12:13, 0:3]
    for k in range(4):
        z = z + h2[:, k:k + 1] * p[8 + k:9 + k, 0:3]

    m = jnp.max(z, axis=-1, keepdims=True)
    e = jnp.exp(z - m)
    d = jnp.sum(e, axis=-1, keepdims=True)
    r = pl.reciprocal(d, approx=True)         # EUP slot (free next to exp)
    r = r * (2.0 - d * r)                     # one Newton step -> ~f32 accuracy
    o_ref[...] = e * r


def net_forward(x, packed_params, *, block_b=4096):
    """x: (B, 2) f32, packed_params: (16, 128) f32. Returns (B, 3) softmax probs."""
    B = x.shape[0]
    bm = B if B <= block_b else block_b       # bm == B (full) or a multiple of 8
    grid = (pl.cdiv(B, bm),)
    return pl.pallas_call(
        mlp_kernel,
        out_shape=jax.ShapeDtypeStruct((B, 3), jnp.float32),
        grid_spec=pltpu.PrefetchScalarGridSpec(
            num_scalar_prefetch=0,
            grid=grid,
            in_specs=[
                pl.BlockSpec((bm, 2), lambda i: (i, 0)),
                # same block index every step -> params stay resident in VMEM
                pl.BlockSpec((_PACK_ROWS, _PACK_COLS), lambda i: (0, 0)),
            ],
            out_specs=pl.BlockSpec((bm, 3), lambda i: (i, 0)),
        ),
        compiler_params=pltpu.CompilerParams(
            dimension_semantics=("parallel",)),
    )(x, packed_params)


def init_params(key):
    """PyTorch nn.Linear-style init (uniform +/- 1/sqrt(fan_in)).

    Weights stored as (in_features, out_features); biases as (out_features,).
    """
    shapes = [(2, 4), (4, 4), (4, 3)]
    params = []
    for fan_in, fan_out in shapes:
        key, kw, kb = jax.random.split(key, 3)
        bound = 1.0 / math.sqrt(fan_in)
        w = jax.random.uniform(kw, (fan_in, fan_out), jnp.float32, -bound, bound)
        b = jax.random.uniform(kb, (fan_out,), jnp.float32, -bound, bound)
        params.extend([w, b])
    return tuple(params)


def pack_params(params):
    """Pack (w1, b1, w2, b2, w3, b3) into a single (16, 128) f32 slab (one DMA)."""
    w1, b1, w2, b2, w3, b3 = params
    p = jnp.zeros((_PACK_ROWS, _PACK_COLS), jnp.float32)
    p = p.at[0:2, 0:4].set(w1)
    p = p.at[2, 0:4].set(b1.reshape(4))
    p = p.at[3:7, 0:4].set(w2)
    p = p.at[7, 0:4].set(b2.reshape(4))
    p = p.at[8:12, 0:3].set(w3)
    p = p.at[12, 0:3].set(b3.reshape(3))
    return p


def reference_forward(x, params):
    """Plain-JAX reference (mirrors the PyTorch forward) for validation."""
    w1, b1, w2, b2, w3, b3 = params
    h1 = jnp.maximum(x @ w1 + b1, 0.0)
    h2 = jnp.maximum(h1 @ w2 + b2, 0.0)
    return jax.nn.softmax(h2 @ w3 + b3, axis=-1)


if __name__ == "__main__":
    key = jax.random.PRNGKey(0)
    key, kx = jax.random.split(key)

    # Small batch of 2-D observations: (batch=8, obs_dim=2)
    x = jax.random.normal(kx, (8, 2), jnp.float32)

    params = init_params(key)
    packed = pack_params(params)   # one-time setup, outside the hot path

    out = jax.block_until_ready(net_forward(x, packed))
    ref = reference_forward(x, params)

    assert out.shape == (8, 3), out.shape
    assert jnp.allclose(jnp.sum(out, axis=-1), 1.0, atol=1e-5), "rows must sum to 1"
    assert jnp.allclose(out, ref, atol=1e-5, rtol=1e-5), "mismatch vs reference"

    print("KERNEL_OK")
</pallas_src>

<mosaic_0001>
module attributes {stable_mosaic.version = 11 : i64} {
  func.func @mlp_kernel(%arg0: i32, %arg1: memref<8x2xf32, #tpu.memory_space<vmem>>, %arg2: memref<16x128xf32, #tpu.memory_space<vmem>>, %arg3: memref<8x3xf32, #tpu.memory_space<vmem>>) attributes {dimension_semantics = [#tpu.dimension_semantics<parallel>], iteration_bounds = array<i64: 1>, scalar_prefetch = 0 : i64, scratch_operands = 0 : i64, tpu.core_type = #tpu.core_type<tc>, window_params = [{transform_indices = @transform_0, window_bounds = array<i64: 8, 2>}, {pipeline_mode = #tpu.pipeline_mode<synchronous>, transform_indices = @transform_1, window_bounds = array<i64: 16, 128>}, {transform_indices = @transform_2, window_bounds = array<i64: 8, 3>}]} {
    %c0 = arith.constant 0 : index
    %c0_0 = arith.constant 0 : index
    %0 = vector.load %arg1[%c0, %c0_0] : memref<8x2xf32, #tpu.memory_space<vmem>>, vector<8x2xf32>
    %c0_1 = arith.constant 0 : index
    %c0_2 = arith.constant 0 : index
    %1 = vector.load %arg2[%c0_1, %c0_2] : memref<16x128xf32, #tpu.memory_space<vmem>>, vector<16x128xf32>
    %2 = vector.extract_strided_slice %1 {offsets = [2, 0], sizes = [1, 4], strides = [1, 1]} : vector<16x128xf32> to vector<1x4xf32>
    %3 = vector.extract_strided_slice %0 {offsets = [0, 0], sizes = [8, 1], strides = [1, 1]} : vector<8x2xf32> to vector<8x1xf32>
    %4 = vector.extract_strided_slice %1 {offsets = [0, 0], sizes = [1, 4], strides = [1, 1]} : vector<16x128xf32> to vector<1x4xf32>
    %5 = vector.broadcast %3 : vector<8x1xf32> to vector<8x4xf32>
    %6 = vector.broadcast %4 : vector<1x4xf32> to vector<8x4xf32>
    %7 = arith.mulf %5, %6 : vector<8x4xf32>
    %8 = vector.broadcast %2 : vector<1x4xf32> to vector<8x4xf32>
    %9 = arith.addf %8, %7 : vector<8x4xf32>
    %10 = vector.extract_strided_slice %0 {offsets = [0, 1], sizes = [8, 1], strides = [1, 1]} : vector<8x2xf32> to vector<8x1xf32>
    %11 = vector.extract_strided_slice %1 {offsets = [1, 0], sizes = [1, 4], strides = [1, 1]} : vector<16x128xf32> to vector<1x4xf32>
    %12 = vector.broadcast %10 : vector<8x1xf32> to vector<8x4xf32>
    %13 = vector.broadcast %11 : vector<1x4xf32> to vector<8x4xf32>
    %14 = arith.mulf %12, %13 : vector<8x4xf32>
    %15 = arith.addf %9, %14 : vector<8x4xf32>
    %cst = arith.constant 0.000000e+00 : f32
    %16 = vector.broadcast %cst : f32 to vector<8x4xf32>
    %17 = arith.maximumf %15, %16 : vector<8x4xf32>
    %18 = vector.extract_strided_slice %1 {offsets = [7, 0], sizes = [1, 4], strides = [1, 1]} : vector<16x128xf32> to vector<1x4xf32>
    %19 = vector.extract_strided_slice %17 {offsets = [0, 0], sizes = [8, 1], strides = [1, 1]} : vector<8x4xf32> to vector<8x1xf32>
    %20 = vector.extract_strided_slice %1 {offsets = [3, 0], sizes = [1, 4], strides = [1, 1]} : vector<16x128xf32> to vector<1x4xf32>
    %21 = vector.broadcast %19 : vector<8x1xf32> to vector<8x4xf32>
    %22 = vector.broadcast %20 : vector<1x4xf32> to vector<8x4xf32>
    %23 = arith.mulf %21, %22 : vector<8x4xf32>
    %24 = vector.broadcast %18 : vector<1x4xf32> to vector<8x4xf32>
    %25 = arith.addf %24, %23 : vector<8x4xf32>
    %26 = vector.extract_strided_slice %17 {offsets = [0, 1], sizes = [8, 1], strides = [1, 1]} : vector<8x4xf32> to vector<8x1xf32>
    %27 = vector.extract_strided_slice %1 {offsets = [4, 0], sizes = [1, 4], strides = [1, 1]} : vector<16x128xf32> to vector<1x4xf32>
    %28 = vector.broadcast %26 : vector<8x1xf32> to vector<8x4xf32>
    %29 = vector.broadcast %27 : vector<1x4xf32> to vector<8x4xf32>
    %30 = arith.mulf %28, %29 : vector<8x4xf32>
    %31 = arith.addf %25, %30 : vector<8x4xf32>
    %32 = vector.extract_strided_slice %17 {offsets = [0, 2], sizes = [8, 1], strides = [1, 1]} : vector<8x4xf32> to vector<8x1xf32>
    %33 = vector.extract_strided_slice %1 {offsets = [5, 0], sizes = [1, 4], strides = [1, 1]} : vector<16x128xf32> to vector<1x4xf32>
    %34 = vector.broadcast %32 : vector<8x1xf32> to vector<8x4xf32>
    %35 = vector.broadcast %33 : vector<1x4xf32> to vector<8x4xf32>
    %36 = arith.mulf %34, %35 : vector<8x4xf32>
    %37 = arith.addf %31, %36 : vector<8x4xf32>
    %38 = vector.extract_strided_slice %17 {offsets = [0, 3], sizes = [8, 1], strides = [1, 1]} : vector<8x4xf32> to vector<8x1xf32>
    %39 = vector.extract_strided_slice %1 {offsets = [6, 0], sizes = [1, 4], strides = [1, 1]} : vector<16x128xf32> to vector<1x4xf32>
    %40 = vector.broadcast %38 : vector<8x1xf32> to vector<8x4xf32>
    %41 = vector.broadcast %39 : vector<1x4xf32> to vector<8x4xf32>
    %42 = arith.mulf %40, %41 : vector<8x4xf32>
    %43 = arith.addf %37, %42 : vector<8x4xf32>
    %cst_3 = arith.constant 0.000000e+00 : f32
    %44 = vector.broadcast %cst_3 : f32 to vector<8x4xf32>
    %45 = arith.maximumf %43, %44 : vector<8x4xf32>
    %46 = vector.extract_strided_slice %1 {offsets = [12, 0], sizes = [1, 3], strides = [1, 1]} : vector<16x128xf32> to vector<1x3xf32>
    %47 = vector.extract_strided_slice %45 {offsets = [0, 0], sizes = [8, 1], strides = [1, 1]} : vector<8x4xf32> to vector<8x1xf32>
    %48 = vector.extract_strided_slice %1 {offsets = [8, 0], sizes = [1, 3], strides = [1, 1]} : vector<16x128xf32> to vector<1x3xf32>
    %49 = vector.broadcast %47 : vector<8x1xf32> to vector<8x3xf32>
    %50 = vector.broadcast %48 : vector<1x3xf32> to vector<8x3xf32>
    %51 = arith.mulf %49, %50 : vector<8x3xf32>
    %52 = vector.broadcast %46 : vector<1x3xf32> to vector<8x3xf32>
    %53 = arith.addf %52, %51 : vector<8x3xf32>
    %54 = vector.extract_strided_slice %45 {offsets = [0, 1], sizes = [8, 1], strides = [1, 1]} : vector<8x4xf32> to vector<8x1xf32>
    %55 = vector.extract_strided_slice %1 {offsets = [9, 0], sizes = [1, 3], strides = [1, 1]} : vector<16x128xf32> to vector<1x3xf32>
    %56 = vector.broadcast %54 : vector<8x1xf32> to vector<8x3xf32>
    %57 = vector.broadcast %55 : vector<1x3xf32> to vector<8x3xf32>
    %58 = arith.mulf %56, %57 : vector<8x3xf32>
    %59 = arith.addf %53, %58 : vector<8x3xf32>
    %60 = vector.extract_strided_slice %45 {offsets = [0, 2], sizes = [8, 1], strides = [1, 1]} : vector<8x4xf32> to vector<8x1xf32>
    %61 = vector.extract_strided_slice %1 {offsets = [10, 0], sizes = [1, 3], strides = [1, 1]} : vector<16x128xf32> to vector<1x3xf32>
    %62 = vector.broadcast %60 : vector<8x1xf32> to vector<8x3xf32>
    %63 = vector.broadcast %61 : vector<1x3xf32> to vector<8x3xf32>
    %64 = arith.mulf %62, %63 : vector<8x3xf32>
    %65 = arith.addf %59, %64 : vector<8x3xf32>
    %66 = vector.extract_strided_slice %45 {offsets = [0, 3], sizes = [8, 1], strides = [1, 1]} : vector<8x4xf32> to vector<8x1xf32>
    %67 = vector.extract_strided_slice %1 {offsets = [11, 0], sizes = [1, 3], strides = [1, 1]} : vector<16x128xf32> to vector<1x3xf32>
    %68 = vector.broadcast %66 : vector<8x1xf32> to vector<8x3xf32>
    %69 = vector.broadcast %67 : vector<1x3xf32> to vector<8x3xf32>
    %70 = arith.mulf %68, %69 : vector<8x3xf32>
    %71 = arith.addf %65, %70 : vector<8x3xf32>
    %cst_4 = arith.constant dense<0xFF800000> : vector<8xf32>
    %72 = vector.multi_reduction <maximumf>, %71, %cst_4 [1] : vector<8x3xf32> to vector<8xf32>
    %73 = vector.shape_cast %72 : vector<8xf32> to vector<8x1xf32>
    %74 = vector.broadcast %73 : vector<8x1xf32> to vector<8x3xf32>
    %75 = arith.subf %71, %74 : vector<8x3xf32>
    %76 = math.exp %75 : vector<8x3xf32>
    %cst_5 = arith.constant dense<0.000000e+00> : vector<8xf32>
    %77 = vector.multi_reduction <add>, %76, %cst_5 [1] : vector<8x3xf32> to vector<8xf32>
    %78 = vector.shape_cast %77 : vector<8xf32> to vector<8x1xf32>
    %79 = tpu.reciprocal %78 {approx = true} : vector<8x1xf32> -> vector<8x1xf32>
    %80 = arith.mulf %78, %79 : vector<8x1xf32>
    %cst_6 = arith.constant 2.000000e+00 : f32
    %81 = vector.broadcast %cst_6 : f32 to vector<8x1xf32>
    %82 = arith.subf %81, %80 : vector<8x1xf32>
    %83 = arith.mulf %79, %82 : vector<8x1xf32>
    %84 = vector.broadcast %83 : vector<8x1xf32> to vector<8x3xf32>
    %85 = arith.mulf %76, %84 : vector<8x3xf32>
    %c0_7 = arith.constant 0 : index
    %c0_8 = arith.constant 0 : index
    %86 = vector.load %arg3[%c0_7, %c0_8] : memref<8x3xf32, #tpu.memory_space<vmem>>, vector<8x3xf32>
    tpu.vector_store %arg3[%c0_7, %c0_8], %85 {strides = array<i32>} : memref<8x3xf32, #tpu.memory_space<vmem>>, vector<8x3xf32>,
    return
  }
  func.func @transform_0(%arg0: i32) -> (i32, i32) {
    %c0_i32 = arith.constant 0 : i32
    %c0_i32_0 = arith.constant 0 : i32
    return %arg0, %c0_i32 : i32, i32
  }
  func.func @transform_1(%arg0: i32) -> (i32, i32) {
    %c0_i32 = arith.constant 0 : i32
    %c0_i32_0 = arith.constant 0 : i32
    %c0_i32_1 = arith.constant 0 : i32
    return %c0_i32, %c0_i32_0 : i32, i32
  }
  func.func @transform_2(%arg0: i32) -> (i32, i32) {
    %c0_i32 = arith.constant 0 : i32
    %c0_i32_0 = arith.constant 0 : i32
    return %arg0, %c0_i32 : i32, i32
  }
}

</mosaic_0001>

<llo_original>
// kernel: tpu_custom_call.1
$region0: #{tpu_custom_call.1}
  #allocation0 [shape = 'u32[]', space=smem, size = 0x4, offset = 0x4, fixed_abs, tag = 'smem constant byte address 0x4 - core index']
  #allocation1 [shape = 'u32[144,128]{1,0:T(1,128)}', space=vmem, size = 0x12000, scoped, tag = 'internal scratch']
  %s0 = inlined_call_operand.vmem [shape: f32[8,2], index: 0, kind: input, shape index: {}]
  %s1 = inlined_call_operand.hbm [shape: f32[16,128], index: 1, kind: input, shape index: {}]
  %s2 = inlined_call_operand.vmem [shape: f32[8,3], index: 2, kind: output, shape index: {}]
  %s3 = sld [smem:[#allocation0]]
  $region22: #{tpu_custom_call.1} parent=0
    _
  %s5 = ssub.s32 1, %s3
  %s6 = scalar_select 0, %s5, %s3
  $region1: #{tpu_custom_call.1} parent=0
    #allocation2 [shape = 'u8[8192]{0}', space=vmem, size = 0x2000, scoped, tag = 'input window, operand 1, single buffered']
    #allocation3 [shape = 's32[1]{0}', space=sflag, size = 0x4, scoped, tag = 'scoped memory for tpu_custom_call.1']
    %7 = vsyncpa [#allocation3], 0
    // Predicated region
    $region2: #{tpu_custom_call.1} parent=1 // pred_check
      _
    $region3: #{tpu_custom_call.1} parent=1 // pred_check_branch
      %9 = sbr.rel (0) target = $region5
    $region4: #{tpu_custom_call.1} parent=1 // pred_region
      _
    $region5: #{tpu_custom_call.1} parent=1 // pred_fallthru
      _
    // Predicated region
    $region6: #{tpu_custom_call.1} parent=1 // pred_check
      _
    $region7: #{tpu_custom_call.1} parent=1 // pred_check_branch
      %11 = sbr.rel (0) target = $region9
    $region8: #{tpu_custom_call.1} parent=1 // pred_region
      %s13 = ssub.s32 256, 256
      %14 = vsyncadd [#allocation3], %s13
      %s15 = sshll.u32 [#allocation2], 4
      %s16 = int_to_ptr.vmem [resolvable:$true] %s15
      %21 = dma.hbm_to_vmem [thread:$0]  %s1, 256, %s16, [#allocation3], 128, 128, 8
    $region9: #{tpu_custom_call.1} parent=1 // pred_fallthru
      _
    // Predicated region
    $region10: #{tpu_custom_call.1} parent=1 // pred_check
      _
    $region11: #{tpu_custom_call.1} parent=1 // pred_check_branch
      %23 = sbr.rel (0) target = $region13
    $region12: #{tpu_custom_call.1} parent=1 // pred_region
      %24 = dma.done [#allocation3], 256
    $region13: #{tpu_custom_call.1} parent=1 // pred_fallthru
      _
    %v25 = vld [vmem:[%s0] sm:$0xff]
    %v26 = vld [vmem:[#allocation2] sm:$0xff]
    %v27 = vld [vmem:[#allocation2 + $0x8] sm:$0xff]
    %29 = vset.pattern.permute.xlu0 0
    %30 = vperm.xlu0 %29, %v25
    %v31 = vpop.permute.xlu0 %30
    %v33 = vlaneseq
    %v34 = vshrl.u32 %v33, 7
    %v35 = vsub.s32 0, %v34
    %v36 = vrot.slane %v26, %v35
    %v37 = vmul.f32 %v31, %v36
    %v38 = vlaneseq
    %v39 = vshrl.u32 %v38, 7
    %v40 = vsub.s32 2, %v39
    %v41 = vrot.slane %v26, %v40
    %v42 = vadd.f32 %v41, %v37
    %43 = vset.pattern.permute.xlu0 1
    %44 = vperm.xlu0 %43, %v25
    %v45 = vpop.permute.xlu0 %44
    %v47 = vlaneseq
    %v48 = vshrl.u32 %v47, 7
    %v49 = vsub.s32 1, %v48
    %v50 = vrot.slane %v26, %v49
    %v51 = vmul.f32 %v45, %v50
    %v52 = vadd.f32 %v42, %v51
    %v53 = vmax.f32 %v52, 0.0
    %55 = vset.pattern.permute.xlu0 0
    %56 = vperm.xlu0 %55, %v53
    %v57 = vpop.permute.xlu0 %56
    %v59 = vlaneseq
    %v60 = vshrl.u32 %v59, 7
    %v61 = vsub.s32 3, %v60
    %v62 = vrot.slane %v26, %v61
    %v63 = vmul.f32 %v57, %v62
    %v64 = vlaneseq
    %v65 = vshrl.u32 %v64, 7
    %v66 = vsub.s32 7, %v65
    %v67 = vrot.slane %v26, %v66
    %v68 = vadd.f32 %v67, %v63
    %69 = vset.pattern.permute.xlu0 1
    %70 = vperm.xlu0 %69, %v53
    %v71 = vpop.permute.xlu0 %70
    %v73 = vlaneseq
    %v74 = vshrl.u32 %v73, 7
    %v75 = vsub.s32 4, %v74
    %v76 = vrot.slane %v26, %v75
    %v77 = vmul.f32 %v71, %v76
    %v78 = vadd.f32 %v68, %v77
    %79 = vset.pattern.permute.xlu0 2
    %80 = vperm.xlu0 %79, %v53
    %v81 = vpop.permute.xlu0 %80
    %v83 = vlaneseq
    %v84 = vshrl.u32 %v83, 7
    %v85 = vsub.s32 5, %v84
    %v86 = vrot.slane %v26, %v85
    %v87 = vmul.f32 %v81, %v86
    %v88 = vadd.f32 %v78, %v87
    %89 = vset.pattern.permute.xlu0 3
    %90 = vperm.xlu0 %89, %v53
    %v91 = vpop.permute.xlu0 %90
    %v93 = vlaneseq
    %v94 = vshrl.u32 %v93, 7
    %v95 = vsub.s32 6, %v94
    %v96 = vrot.slane %v26, %v95
    %v97 = vmul.f32 %v91, %v96
    %v98 = vadd.f32 %v88, %v97
    %v99 = vmax.f32 %v98, 0.0
    %101 = vset.pattern.permute.xlu0 0
    %102 = vperm.xlu0 %101, %v99
    %v103 = vpop.permute.xlu0 %102
    %v105 = vlaneseq
    %v106 = vshrl.u32 %v105, 7
    %v107 = vsub.s32 0, %v106
    %v108 = vrot.slane %v27, %v107
    %v109 = vmul.f32 %v103, %v108
    %v110 = vlaneseq
    %v111 = vshrl.u32 %v110, 7
    %v112 = vsub.s32 4, %v111
    %v113 = vrot.slane %v27, %v112
    %v114 = vadd.f32 %v113, %v109
    %115 = vset.pattern.permute.xlu0 1
    %116 = vperm.xlu0 %115, %v99
    %v117 = vpop.permute.xlu0 %116
    %v119 = vlaneseq
    %v120 = vshrl.u32 %v119, 7
    %v121 = vsub.s32 1, %v120
    %v122 = vrot.slane %v27, %v121
    %v123 = vmul.f32 %v117, %v122
    %v124 = vadd.f32 %v114, %v123
    %125 = vset.pattern.permute.xlu0 2
    %126 = vperm.xlu0 %125, %v99
    %v127 = vpop.permute.xlu0 %126
    %v129 = vlaneseq
    %v130 = vshrl.u32 %v129, 7
    %v131 = vsub.s32 2, %v130
    %v132 = vrot.slane %v27, %v131
    %v133 = vmul.f32 %v127, %v132
    %v134 = vadd.f32 %v124, %v133
    %135 = vset.pattern.permute.xlu0 3
    %136 = vperm.xlu0 %135, %v99
    %v137 = vpop.permute.xlu0 %136
    %v139 = vlaneseq
    %v140 = vshrl.u32 %v139, 7
    %v141 = vsub.s32 3, %v140
    %v142 = vrot.slane %v27, %v141
    %v143 = vmul.f32 %v137, %v142
    %v144 = vadd.f32 %v134, %v143
    %vm145 = vcmask 23552
    %v146 = vsel %vm145, %v144, -inf
    %147 = vmax.xlane.f32.xlu0 %v146
    %v148 = vpop.xlane.xlu0 %147
    %v149 = vsub.f32 %v144, %v148
    %v150 = vmul.f32 %v149, 1.442695
    %v151 = vpow.pop %v150
    %v152 = vsel %vm145, %v151, 0.0
    %153 = vadd.xlane.f32.xlu0 %v152
    %v154 = vpop.xlane.xlu0 %153
    %v155 = vrcp.pop %v154
    %v156 = vmul.f32 %v154, %v155
    %v157 = vsub.f32 2.0, %v156
    %v158 = vmul.f32 %v155, %v157
    %v159 = vmul.f32 %v151, %v158
    %160 = vst.msk [vmem:[%s2] sm:$0xff] %vm145, %v159
    // Predicated region
    $region14: #{tpu_custom_call.1} parent=1 // pred_check
      _
    $region15: #{tpu_custom_call.1} parent=1 // pred_check_branch
      %162 = sbr.rel (0) target = $region17
    $region16: #{tpu_custom_call.1} parent=1 // pred_region
      _
    $region17: #{tpu_custom_call.1} parent=1 // pred_fallthru
      _
    // Predicated region
    $region18: #{tpu_custom_call.1} parent=1 // pred_check
      _
    $region19: #{tpu_custom_call.1} parent=1 // pred_check_branch
      %164 = sbr.rel (0) target = $region21
    $region20: #{tpu_custom_call.1} parent=1 // pred_region
      _
    $region21: #{tpu_custom_call.1} parent=1 // pred_fallthru
      _
    %165 = vsyncpa [#allocation3], 1

</llo_original>
